<compile_context>
chip_gen: v6e
topology: v6e:2x2x1
jax: 0.10.0
libtpu: 0.0.40
codegen_flags: <defaults>
</compile_context>

<pallas_src>
import jax
import jax.numpy as jnp
from jax.experimental import pallas as pl
from jax.experimental.pallas import tpu as pltpu


def _round_up(x, m):
    return ((x + m - 1) // m) * m


def _shape_layer_kernel(params_ref, comps_ref, mean_ref, out_ref):
    # out[b, n] = sum_c params[b, c] * comps[c, n] + mean[0, n]
    acc = jnp.dot(params_ref[...], comps_ref[...],
                  preferred_element_type=jnp.float32)
    out_ref[...] = (acc + mean_ref[...]).astype(out_ref.dtype)


def shape_layer_forward(shape_params, mean, components, *, force_pallas=False):
    """Pallas ShapeLayer forward.

    shape_params: (B, C, 1, 1) float32
    mean:         (1, P, D)    float32
    components:   (1, C, P, D) float32
    returns:      (B, P, D)    float32
    """
    B = shape_params.shape[0]
    _, C, P, D = components.shape
    N = P * D

    params2d = shape_params.reshape(B, C).astype(jnp.float32)   # (B, C)
    comps2d = components.reshape(C, N)                           # (C, N)
    mean2d = mean.reshape(1, N)                                  # (1, N)

    # ---- small-problem fast path -------------------------------------------
    # Fixed ~us pallas_call / pipeline overhead dominates below ~256 KB of
    # total traffic; fused XLA wins there.
    total_bytes = 4 * (B * C + C * N + N + B * N)
    if total_bytes < (256 << 10) and not force_pallas:
        out = jnp.dot(params2d, comps2d,
                      precision=jax.lax.Precision.HIGHEST) + mean2d
        return out.reshape(B, P, D)

    LANE = 128   # f32 lane width

    # ---- tile sizing --------------------------------------------------------
    # Batch tile: whole B when it fits one tile (block dim == full array dim is
    # always legal), otherwise 128-row tiles with a masked partial edge block.
    TB = B if B <= 128 else 128
    n_b = pl.cdiv(B, TB)

    # Lane tile: lane-dense, multiple of 128 (or the full dim), up to 2048.
    n_lane = _round_up(N, LANE)
    if N <= LANE:
        TN = N
    else:
        TN = min(2048, n_lane)
        # Keep >= 2 grid programs so a v7x megacore has work for both TCs.
        if n_b == 1 and pl.cdiv(N, TN) < 2:
            TN = max(LANE, _round_up(-(-n_lane // 2), LANE))

    # Bound the double-buffered working set well under the 32 MiB scoped VMEM
    # limit (v7x has only 64 MiB physical / 32 MiB scoped default).
    def _footprint(tb, tn, c):
        return 2 * 4 * (tb * tn + c * tn + tn + tb * c)

    while TN > LANE and _footprint(TB, TN, C) > (24 << 20):
        TN = max(LANE, _round_up(TN // 2, LANE))

    n_n = pl.cdiv(N, TN)
    grid = (n_n, n_b)   # N tiles outer, B tiles inner -> comps streamed once.

    cost = pl.CostEstimate(
        flops=2 * B * C * N,
        transcendentals=0,
        bytes_accessed=4 * (C * N + B * N + N + n_n * B * C),
    )

    # TODO(synk): on low-HBM-bandwidth parts (v5e) optionally cast the
    # dominant `components` stream to bf16 in the wrapper (f32 accumulate via
    # preferred_element_type) to roughly halve kernel time; kept f32 here to
    # preserve exact reference tolerances.
    out = pl.pallas_call(
        _shape_layer_kernel,
        out_shape=jax.ShapeDtypeStruct((B, N), jnp.float32),
        grid_spec=pltpu.PrefetchScalarGridSpec(
            num_scalar_prefetch=0,
            grid=grid,
            in_specs=[
                # params: tiny, re-fetched per step.
                pl.BlockSpec((TB, C), lambda j, i: (i, 0)),
                # components: dominant HBM stream; index depends only on the
                # outer N axis, so it stays resident across all batch tiles.
                pl.BlockSpec((C, TN), lambda j, i: (0, j)),
                # mean: broadcast over batch, tiled along lanes.
                pl.BlockSpec((1, TN), lambda j, i: (0, j)),
            ],
            out_specs=pl.BlockSpec((TB, TN), lambda j, i: (i, j)),
        ),
        compiler_params=pltpu.CompilerParams(
            # C is contracted fully in-kernel; both grid axes independent.
            dimension_semantics=("parallel", "parallel"),
            vmem_limit_bytes=32 * 1024 * 1024,
        ),
        cost_estimate=cost,
    )(params2d, comps2d, mean2d)

    return out.reshape(B, P, D)


if __name__ == "__main__":
    def ref_fn(shape_params, mean, components):
        # Mirrors the PyTorch expand/mul/sum/add exactly (pure VPU math).
        B = shape_params.shape[0]
        comps_exp = jnp.broadcast_to(components, (B,) + components.shape[1:])
        weighted = comps_exp * jnp.broadcast_to(shape_params, comps_exp.shape)
        return mean + weighted.sum(axis=1)

    # 1) Small shapes, forced through the Pallas path (single-tile grid).
    B, C, P, D = 2, 8, 16, 2
    k1, k2, k3 = jax.random.split(jax.random.PRNGKey(0), 3)
    shape_params = jax.random.normal(k1, (B, C, 1, 1), dtype=jnp.float32)
    mean = jax.random.normal(k2, (1, P, D), dtype=jnp.float32)
    components = jax.random.normal(k3, (1, C, P, D), dtype=jnp.float32)

    out = jax.block_until_ready(
        shape_layer_forward(shape_params, mean, components, force_pallas=True))
    ref = ref_fn(shape_params, mean, components)
    assert out.shape == (B, P, D)
    assert jnp.allclose(out, ref, atol=1e-5, rtol=1e-5)

    # 2) Same inputs through the small-problem fast path (default).
    out_fast = jax.block_until_ready(
        shape_layer_forward(shape_params, mean, components))
    assert jnp.allclose(out_fast, ref, atol=1e-5, rtol=1e-5)

    # 3) Slightly larger shapes exercising a multi-tile grid with masked
    #    partial edge blocks (N = 320 does not divide the 256-lane tile).
    B2, C2, P2, D2 = 4, 8, 160, 2
    k4, k5, k6 = jax.random.split(jax.random.PRNGKey(1), 3)
    sp2 = jax.random.normal(k4, (B2, C2, 1, 1), dtype=jnp.float32)
    mean2 = jax.random.normal(k5, (1, P2, D2), dtype=jnp.float32)
    comps2 = jax.random.normal(k6, (1, C2, P2, D2), dtype=jnp.float32)

    out2 = jax.block_until_ready(
        shape_layer_forward(sp2, mean2, comps2, force_pallas=True))
    ref2 = ref_fn(sp2, mean2, comps2)
    assert out2.shape == (B2, P2, D2)
    assert jnp.allclose(out2, ref2, atol=1e-5, rtol=1e-5)

    print("KERNEL_OK")
</pallas_src>

<mosaic_0001>
module attributes {stable_mosaic.version = 11 : i64} {
  func.func @_shape_layer_kernel(%arg0: i32, %arg1: i32, %arg2: memref<2x8xf32, #tpu.memory_space<vmem>>, %arg3: memref<8x32xf32, #tpu.memory_space<vmem>>, %arg4: memref<1x32xf32, #tpu.memory_space<vmem>>, %arg5: memref<2x32xf32, #tpu.memory_space<vmem>>) attributes {dimension_semantics = [#tpu.dimension_semantics<parallel>, #tpu.dimension_semantics<parallel>], iteration_bounds = array<i64: 1, 1>, scalar_prefetch = 0 : i64, scratch_operands = 0 : i64, tpu.core_type = #tpu.core_type<tc>, window_params = [{transform_indices = @transform_0, window_bounds = array<i64: 2, 8>}, {transform_indices = @transform_1, window_bounds = array<i64: 8, 32>}, {transform_indices = @transform_2, window_bounds = array<i64: 1, 32>}, {transform_indices = @transform_3, window_bounds = array<i64: 2, 32>}]} {
    %c0 = arith.constant 0 : index
    %c0_0 = arith.constant 0 : index
    %0 = vector.load %arg2[%c0, %c0_0] : memref<2x8xf32, #tpu.memory_space<vmem>>, vector<2x8xf32>
    %c0_1 = arith.constant 0 : index
    %c0_2 = arith.constant 0 : index
    %1 = vector.load %arg3[%c0_1, %c0_2] : memref<8x32xf32, #tpu.memory_space<vmem>>, vector<8x32xf32>
    %cst = arith.constant dense<0.000000e+00> : vector<2x32xf32>
    %2 = tpu.matmul %0, %1, %cst {dimension_numbers = #tpu.dot_dimension_numbers<[1], [0], [0], [1], [0, 0, 1, 1], [], []>} : vector<2x8xf32>, vector<8x32xf32>, vector<2x32xf32> -> vector<2x32xf32>
    %c0_3 = arith.constant 0 : index
    %c0_4 = arith.constant 0 : index
    %3 = vector.load %arg4[%c0_3, %c0_4] : memref<1x32xf32, #tpu.memory_space<vmem>>, vector<1x32xf32>
    %4 = vector.broadcast %3 : vector<1x32xf32> to vector<2x32xf32>
    %5 = arith.addf %2, %4 : vector<2x32xf32>
    %c0_5 = arith.constant 0 : index
    %c0_6 = arith.constant 0 : index
    %6 = vector.load %arg5[%c0_5, %c0_6] : memref<2x32xf32, #tpu.memory_space<vmem>>, vector<2x32xf32>
    tpu.vector_store %arg5[%c0_5, %c0_6], %5 {strides = array<i32>} : memref<2x32xf32, #tpu.memory_space<vmem>>, vector<2x32xf32>,
    return
  }
  func.func @transform_0(%arg0: i32, %arg1: i32) -> (i32, i32) {
    %c0_i32 = arith.constant 0 : i32
    %c0_i32_0 = arith.constant 0 : i32
    return %arg1, %c0_i32 : i32, i32
  }
  func.func @transform_1(%arg0: i32, %arg1: i32) -> (i32, i32) {
    %c0_i32 = arith.constant 0 : i32
    %c0_i32_0 = arith.constant 0 : i32
    return %c0_i32, %arg0 : i32, i32
  }
  func.func @transform_2(%arg0: i32, %arg1: i32) -> (i32, i32) {
    %c0_i32 = arith.constant 0 : i32
    %c0_i32_0 = arith.constant 0 : i32
    return %c0_i32, %arg0 : i32, i32
  }
  func.func @transform_3(%arg0: i32, %arg1: i32) -> (i32, i32) {
    %c0_i32 = arith.constant 0 : i32
    return %arg1, %arg0 : i32, i32
  }
}

</mosaic_0001>

<llo_original>
// kernel: tpu_custom_call.1
$region0: #{tpu_custom_call.1}
  #allocation0 [shape = 'u32[]', space=smem, size = 0x4, offset = 0x4, fixed_abs, tag = 'smem constant byte address 0x4 - core index']
  #allocation1 [shape = 'u32[144,128]{1,0:T(1,128)}', space=vmem, size = 0x12000, scoped, tag = 'internal scratch']
  %s0 = inlined_call_operand.hbm [shape: f32[2,8], index: 0, kind: input, shape index: {}]
  %s1 = inlined_call_operand.hbm [shape: f32[8,32], index: 1, kind: input, shape index: {}]
  %s2 = inlined_call_operand.vmem [shape: f32[1,32], index: 2, kind: input, shape index: {}]
  %s3 = inlined_call_operand.hbm [shape: f32[2,32], index: 3, kind: output, shape index: {}]
  %s4 = sld [smem:[#allocation0]]
  $region30: #{tpu_custom_call.1} parent=0
    _
  %s6 = ssub.s32 1, %s4
  %s7 = scalar_select 0, %s6, %s4
  $region1: #{tpu_custom_call.1} parent=0
    #allocation2 [shape = 'u8[1024]{0}', space=vmem, size = 0x400, scoped, tag = 'input window, operand 0, single buffered']
    #allocation3 [shape = 's32[1]{0}', space=sflag, size = 0x4, scoped, tag = 'scoped memory for tpu_custom_call.1']
    #allocation4 [shape = 's32[1]{0}', space=sflag, size = 0x4, scoped, tag = 'scoped memory for tpu_custom_call.1']
    #allocation5 [shape = 'u8[4096]{0}', space=vmem, size = 0x1000, scoped, tag = 'input window, operand 1, single buffered']
    #allocation6 [shape = 's32[1]{0}', space=sflag, size = 0x4, scoped, tag = 'scoped memory for tpu_custom_call.1']
    #allocation7 [shape = 'u8[1024]{0}', space=vmem, size = 0x400, scoped, tag = 'output window, operand 0, single buffered']
    %8 = vsyncpa [#allocation3], 0
    %9 = vsyncpa [#allocation6], 0
    %10 = vsyncpa [#allocation4], 0
    // Predicated region
    $region2: #{tpu_custom_call.1} parent=1 // pred_check
      _
    $region3: #{tpu_custom_call.1} parent=1 // pred_check_branch
      %12 = sbr.rel (0) target = $region5
    $region4: #{tpu_custom_call.1} parent=1 // pred_region
      %s14 = ssub.s32 32, 32
      %15 = vsyncadd [#allocation3], %s14
      %s17 = sshll.u32 [#allocation2], 4
      %s18 = int_to_ptr.vmem [resolvable:$true] %s17
      %20 = dma.hbm_to_vmem [thread:$0]  %s0, 32, %s18, [#allocation3]
    $region5: #{tpu_custom_call.1} parent=1 // pred_fallthru
      _
    // Predicated region
    $region6: #{tpu_custom_call.1} parent=1 // pred_check
      _
    $region7: #{tpu_custom_call.1} parent=1 // pred_check_branch
      %22 = sbr.rel (0) target = $region9
    $region8: #{tpu_custom_call.1} parent=1 // pred_region
      %s24 = ssub.s32 128, 128
      %25 = vsyncadd [#allocation6], %s24
      %s27 = sshll.u32 [#allocation5], 4
      %s28 = int_to_ptr.vmem [resolvable:$true] %s27
      %30 = dma.hbm_to_vmem [thread:$0]  %s1, 128, %s28, [#allocation6]
    $region9: #{tpu_custom_call.1} parent=1 // pred_fallthru
      _
    // Predicated region
    $region10: #{tpu_custom_call.1} parent=1 // pred_check
      _
    $region11: #{tpu_custom_call.1} parent=1 // pred_check_branch
      %32 = sbr.rel (0) target = $region13
    $region12: #{tpu_custom_call.1} parent=1 // pred_region
      _
    $region13: #{tpu_custom_call.1} parent=1 // pred_fallthru
      _
    // Predicated region
    $region14: #{tpu_custom_call.1} parent=1 // pred_check
      _
    $region15: #{tpu_custom_call.1} parent=1 // pred_check_branch
      %34 = sbr.rel (0) target = $region17
    $region16: #{tpu_custom_call.1} parent=1 // pred_region
      %35 = dma.done [#allocation3], 32
    $region17: #{tpu_custom_call.1} parent=1 // pred_fallthru
      _
    // Predicated region
    $region18: #{tpu_custom_call.1} parent=1 // pred_check
      _
    $region19: #{tpu_custom_call.1} parent=1 // pred_check_branch
      %37 = sbr.rel (0) target = $region21
    $region20: #{tpu_custom_call.1} parent=1 // pred_region
      %38 = dma.done [#allocation6], 128
    $region21: #{tpu_custom_call.1} parent=1 // pred_fallthru
      _
    %v39 = vld [vmem:[#allocation2] sm:$0x3]
    %v40 = vld [vmem:[#allocation5] sm:$0xff]
    %v41 = vld [vmem:[%s2] sm:$0x1]
    %v43 = vlaneseq
    %v44 = vshrl.u32 %v43, 7
    %v45 = vsub.s32 0, %v44
    %v46 = vrot.slane %v41, %v45
    %vm48 = vcmask 64512
    %v50 = vsel %vm48, %v39, 0
    %52 = vmatprep.subr.mxu0 0.0
    %53 = vmatpush1.msra.mxu0 0.0
    %54 = vmatprep.subr.mxu0 0.0
    %55 = vmatpush1.msra.mxu0 0.0
    %56 = vmatprep.subr.mxu0 0.0
    %57 = vmatpush1.msra.mxu0 0.0
    %58 = vmatprep.subr.mxu0 0.0
    %59 = vmatpush1.msra.mxu0 0.0
    %60 = vmatprep.subr.mxu0 0.0
    %61 = vmatpush1.msra.mxu0 0.0
    %62 = vmatprep.subr.mxu0 0.0
    %63 = vmatpush1.msra.mxu0 0.0
    %64 = vmatprep.subr.mxu0 0.0
    %65 = vmatpush1.msra.mxu0 0.0
    %66 = vmatprep.subr.mxu0 0.0
    %67 = vmatpush1.msra.mxu0 0.0
    %68 = vmatprep.subr.mxu0 0.0
    %69 = vmatpush1.msra.mxu0 0.0
    %70 = vmatprep.subr.mxu0 0.0
    %71 = vmatpush1.msra.mxu0 0.0
    %72 = vmatprep.subr.mxu0 0.0
    %73 = vmatpush1.msra.mxu0 0.0
    %74 = vmatprep.subr.mxu0 0.0
    %75 = vmatpush1.msra.mxu0 0.0
    %76 = vmatprep.subr.mxu0 0.0
    %77 = vmatpush1.msra.mxu0 0.0
    %78 = vmatprep.subr.mxu0 0.0
    %79 = vmatpush1.msra.mxu0 0.0
    %80 = vmatprep.subr.mxu0 0.0
    %81 = vmatpush1.msra.mxu0 0.0
    %82 = vmatprep.subr.mxu0 0.0
    %83 = vmatpush1.msra.mxu0 %v40
    %84 = vmatprep.subr.mxu0 0.0
    %85 = vmatpush2.msra.mxu0 0.0
    %86 = vmatprep.subr.mxu0 0.0
    %87 = vmatpush2.msra.mxu0 0.0
    %88 = vmatprep.subr.mxu0 0.0
    %89 = vmatpush2.msra.mxu0 0.0
    %90 = vmatprep.subr.mxu0 0.0
    %91 = vmatpush2.msra.mxu0 0.0
    %92 = vmatprep.subr.mxu0 0.0
    %93 = vmatpush2.msra.mxu0 0.0
    %94 = vmatprep.subr.mxu0 0.0
    %95 = vmatpush2.msra.mxu0 0.0
    %96 = vmatprep.subr.mxu0 0.0
    %97 = vmatpush2.msra.mxu0 0.0
    %98 = vmatprep.subr.mxu0 0.0
    %99 = vmatpush2.msra.mxu0 0.0
    %100 = vmatprep.subr.mxu0 0.0
    %101 = vmatpush2.msra.mxu0 0.0
    %102 = vmatprep.subr.mxu0 0.0
    %103 = vmatpush2.msra.mxu0 0.0
    %104 = vmatprep.subr.mxu0 0.0
    %105 = vmatpush2.msra.mxu0 0.0
    %106 = vmatprep.subr.mxu0 0.0
    %107 = vmatpush2.msra.mxu0 0.0
    %108 = vmatprep.subr.mxu0 0.0
    %109 = vmatpush2.msra.mxu0 0.0
    %110 = vmatprep.subr.mxu0 0.0
    %111 = vmatpush2.msra.mxu0 0.0
    %112 = vmatprep.subr.mxu0 0.0
    %113 = vmatpush2.msra.mxu0 0.0
    %114 = vmatprep.subr.mxu0 0.0
    %115 = vmatpush2.msra.mxu0 0.0
    %116 = vmatprep.mubr.f32.mxu0 0.0
    %117 = vmatmul.mubr.f32.gmra.mxu0 %v50
    %v118 = vpop.f32.mrf.mxu0
    %v119 = vadd.f32 %v46, %v118
    %v120 = vpop.f32.mrf.mxu0
    %121 = vdwg.mxu0
    %vm122 = vcmask 254976
    %123 = vst.msk [vmem:[#allocation7] sm:$0x3] %vm122, %v119
    // Predicated region
    $region22: #{tpu_custom_call.1} parent=1 // pred_check
      _
    $region23: #{tpu_custom_call.1} parent=1 // pred_check_branch
      %125 = sbr.rel (0) target = $region25
    $region24: #{tpu_custom_call.1} parent=1 // pred_region
      %s127 = ssub.s32 32, 32
      %128 = vsyncadd [#allocation4], %s127
      %s130 = sshll.u32 [#allocation7], 4
      %s131 = int_to_ptr.vmem [resolvable:$true] %s130
      %133 = dma.vmem_to_hbm [thread:$0]  %s131, 32, %s3, [#allocation4]
    $region25: #{tpu_custom_call.1} parent=1 // pred_fallthru
      _
    // Predicated region
    $region26: #{tpu_custom_call.1} parent=1 // pred_check
      _
    $region27: #{tpu_custom_call.1} parent=1 // pred_check_branch
      %135 = sbr.rel (0) target = $region29
    $region28: #{tpu_custom_call.1} parent=1 // pred_region
      %136 = dma.done [#allocation4], 32
    $region29: #{tpu_custom_call.1} parent=1 // pred_fallthru
      _
    %137 = vsyncpa [#allocation3], 1
    %138 = vsyncpa [#allocation6], 1
    %139 = vsyncpa [#allocation4], 1

</llo_original>
